<compile_context>
chip_gen: v5e
topology: v5e:2x2
jax: 0.10.0
libtpu: 0.0.40
codegen_flags: <defaults>
</compile_context>

<pallas_src>
import math
import jax
import jax.numpy as jnp
from jax.experimental import pallas as pl

# ---- model dimensions (small, deterministic) -------------------------------
B = 2          # batch
S = 7          # input sequence length (tokens after cls prepend = 8)
D_IN = 16      # dim_input
D_HID = 32     # dim_hidden
D_OUT = 16     # dim_output
NUM_EMB = 2    # num_emb (pos_emb=True)
H = 4          # attention heads
HD = D_HID // H
D_FF = 4 * D_HID
EPS = 1e-5
SCALE = 1.0 / math.sqrt(HD)
BS = B * S     # flattened non-cls tokens

# ---- dense parameter-slab layout (rows x 128 lanes, f32, one DMA) ----------
LANES = 128
R_W1,   C_W1   = 0,  0      # (32, 128)  MLP up
R_W2,   C_W2   = 32, 0      # (128, 32)  MLP down
R_WO,   C_WO   = 32, 32     # (32, 32)   attention output projection
R_WVS,  C_WVS  = 32, 64     # (32, 36)   [wv | W_s]  (V + fused score weight)
R_WOUT, C_WOUT = 32, 100    # (32, 16)   proj_out
R_WIN,  C_WIN  = 64, 32     # (16, 32)   proj_in
R_MISC, C_MISC = 80, 32     # (32, 32)   head mask^T, vectors, batch selectors
SLAB_ROWS = 160

# row slots inside the misc block
M_HMT = 0               # (H, D_HID) head-mask transpose
M_CLS = 4               # cls_token + query_emb[0]
M_EMB1 = 5              # query_emb[1]
M_LN1G, M_LN1B = 6, 7
M_LN2G, M_LN2B = 8, 9
M_VCLS = 10             # V of the cls row (precomputed)
M_SCLS = 11             # per-head cls self-score (lanes 0:H)
M_BSEL = 12             # (B, B*S) batch selector
M_BSELT = 14            # (B*S, B) its transpose


def _gelu(x):
    # tanh-approx GELU (transcendental goes to the EUP)
    # TODO(synk): reference MLP activation unspecified; nn.GELU(erf) would
    # differ at ~1e-3 level.
    c = math.sqrt(2.0 / math.pi)
    return 0.5 * x * (1.0 + jnp.tanh(c * (x + 0.044715 * x * x * x)))


def _layernorm(x, gamma, beta):
    mu = jnp.mean(x, axis=-1, keepdims=True)
    var = jnp.mean((x - mu) ** 2, axis=-1, keepdims=True)
    return (x - mu) * jax.lax.rsqrt(var + EPS) * gamma + beta


def attenuator_kernel(x_ref, slab_ref, o_ref):
    # ---- static views of the dense, VMEM-resident parameter slab -----------
    w1    = slab_ref[R_W1:R_W1 + D_HID, :]                          # (32,128)
    w2    = slab_ref[R_W2:R_W2 + D_FF, C_W2:C_W2 + D_HID]           # (128,32)
    wo    = slab_ref[R_WO:R_WO + D_HID, C_WO:C_WO + D_HID]          # (32,32)
    w_vs  = slab_ref[R_WVS:R_WVS + D_HID, C_WVS:C_WVS + D_HID + H]  # (32,36)
    w_out = slab_ref[R_WOUT:R_WOUT + D_HID, C_WOUT:C_WOUT + D_OUT]  # (32,16)
    w_in  = slab_ref[R_WIN:R_WIN + D_IN, C_WIN:C_WIN + D_HID]       # (16,32)
    misc  = slab_ref[R_MISC:R_MISC + 32, C_MISC:C_MISC + 32]        # (32,32)

    hmt     = misc[M_HMT:M_HMT + H]            # (H, D_HID) head-mask^T
    cls_row = misc[M_CLS:M_CLS + 1]            # cls_token + query_emb[0]
    emb1    = misc[M_EMB1:M_EMB1 + 1]          # query_emb[1]
    ln1_g, ln1_b = misc[M_LN1G:M_LN1G + 1], misc[M_LN1B:M_LN1B + 1]
    ln2_g, ln2_b = misc[M_LN2G:M_LN2G + 1], misc[M_LN2B:M_LN2B + 1]
    v_cls   = misc[M_VCLS:M_VCLS + 1]          # (1, D_HID)
    s_cls   = misc[M_SCLS:M_SCLS + 1, 0:H]     # (1, H)
    bsel    = misc[M_BSEL:M_BSEL + B, 0:BS]    # (B, B*S) 0/1 batch selector
    bselt   = misc[M_BSELT:M_BSELT + BS, 0:B]  # (B*S, B)

    # ---- all non-cls tokens of all batches processed as ONE (B*S, .) tile --
    xb = jnp.dot(x_ref[...], w_in, preferred_element_type=jnp.float32) + emb1
    hb = _layernorm(xb, ln1_g, ln1_b)                                # (BS,32)

    # one push -> values AND per-head scores of the cls query vs these keys
    vs = jnp.dot(hb, w_vs, preferred_element_type=jnp.float32)       # (BS,36)
    vb = vs[:, 0:D_HID]                                              # (BS,32)
    sb = vs[:, D_HID:D_HID + H]                                      # (BS,H)

    # per-batch softmax over (cls + S tokens), per head
    m = jnp.maximum(
        jnp.concatenate(
            [jnp.max(sb[b * S:(b + 1) * S], axis=0, keepdims=True)
             for b in range(B)], axis=0),
        s_cls)                                                       # (B, H)
    m_tok = jnp.dot(bselt, m, preferred_element_type=jnp.float32)    # (BS, H)
    pb    = jnp.exp(sb - m_tok)                                      # (BS, H)
    p_cls = jnp.exp(s_cls - m)                                       # (B, H)
    denom = jnp.dot(bsel, pb, preferred_element_type=jnp.float32) + p_cls
    inv   = pl.reciprocal(denom, approx=True)                        # (B, H)

    # weighted values: expand per-head probs to lanes via hm^T, reduce per batch
    pv  = jnp.dot(pb, hmt, preferred_element_type=jnp.float32) * vb  # (BS,32)
    att = jnp.dot(bsel, pv, preferred_element_type=jnp.float32)      # (B, 32)
    att = att + jnp.dot(p_cls, hmt, preferred_element_type=jnp.float32) * v_cls
    att = att * jnp.dot(inv, hmt, preferred_element_type=jnp.float32)
    att = jnp.dot(att, wo, preferred_element_type=jnp.float32)       # (B, 32)

    # residual + MLP on the cls row only (ClsToken pooling discards the rest)
    xc = cls_row + att
    h2 = _layernorm(xc, ln2_g, ln2_b)
    f = jnp.dot(_gelu(jnp.dot(h2, w1, preferred_element_type=jnp.float32)),
                w2, preferred_element_type=jnp.float32)
    xc = xc + f

    # proj_out on the pooled (cls) rows of all batches at once
    o_ref[...] = jnp.dot(xc, w_out, preferred_element_type=jnp.float32)


def attenuator_forward(x, slab):
    """x: (B, S, D_IN) f32, slab: (SLAB_ROWS, 128) f32 -> (B, D_OUT) f32."""
    x_flat = x.reshape(BS, D_IN)   # clean 2-D DMA, all batches in one tile
    return pl.pallas_call(
        attenuator_kernel,
        out_shape=jax.ShapeDtypeStruct((B, D_OUT), jnp.float32),
        in_specs=[pl.BlockSpec((BS, D_IN), lambda: (0, 0)),
                  pl.BlockSpec((SLAB_ROWS, LANES), lambda: (0, 0))],
        out_specs=pl.BlockSpec((B, D_OUT), lambda: (0, 0)),
    )(x_flat, slab)


def pack_params(params):
    """Fold the batch-invariant cls-token path into the parameters and pack
    everything into ONE dense (SLAB_ROWS, 128) f32 slab -> a single DMA."""
    (w_in, cls, emb, ln1_g, ln1_b, wq, wk, wv, wo,
     ln2_g, ln2_b, w1, w2, w_out) = params

    head_mask = (jnp.arange(D_HID)[:, None] // HD
                 == jnp.arange(H)[None, :]).astype(jnp.float32)      # (32, H)
    cls_row = cls + emb[0:1]                                         # (1, 32)

    # ---- batch-invariant cls path, computed once offline -------------------
    mu = jnp.mean(cls_row, axis=-1, keepdims=True)
    var = jnp.mean((cls_row - mu) ** 2, axis=-1, keepdims=True)
    h_cls = (cls_row - mu) * jax.lax.rsqrt(var + EPS) * ln1_g + ln1_b
    q_cls = jnp.dot(h_cls, wq) * SCALE                               # (1, 32)
    k_cls = jnp.dot(h_cls, wk)
    v_cls = jnp.dot(h_cls, wv)                                       # (1, 32)
    s_cls = jnp.dot(q_cls * k_cls, head_mask)                        # (1, H)
    w_s   = jnp.dot(wk * q_cls, head_mask)                           # (32, H)
    w_vs  = jnp.concatenate([wv, w_s], axis=1)                       # (32, 36)

    bsel = (jnp.arange(B)[:, None]
            == jnp.arange(BS)[None, :] // S).astype(jnp.float32)     # (B, BS)

    misc = jnp.zeros((32, 32), jnp.float32)
    misc = misc.at[M_HMT:M_HMT + H].set(head_mask.T)
    misc = misc.at[M_CLS].set(cls_row[0])
    misc = misc.at[M_EMB1].set(emb[1])
    misc = misc.at[M_LN1G].set(ln1_g[0]);  misc = misc.at[M_LN1B].set(ln1_b[0])
    misc = misc.at[M_LN2G].set(ln2_g[0]);  misc = misc.at[M_LN2B].set(ln2_b[0])
    misc = misc.at[M_VCLS].set(v_cls[0])
    misc = misc.at[M_SCLS, 0:H].set(s_cls[0])
    misc = misc.at[M_BSEL:M_BSEL + B, 0:BS].set(bsel)
    misc = misc.at[M_BSELT:M_BSELT + BS, 0:B].set(bsel.T)

    slab = jnp.zeros((SLAB_ROWS, LANES), jnp.float32)
    for (r, c), a in (((R_W1, C_W1), w1), ((R_W2, C_W2), w2),
                      ((R_WO, C_WO), wo), ((R_WVS, C_WVS), w_vs),
                      ((R_WOUT, C_WOUT), w_out), ((R_WIN, C_WIN), w_in),
                      ((R_MISC, C_MISC), misc)):
        slab = slab.at[r:r + a.shape[0], c:c + a.shape[1]].set(a)
    return slab


def init_params(key):
    """Deterministic init matching the module's initialize(): Linear /
    Embedding weights ~ N(0, 0.02), LayerNorm gamma=1 beta=0, no FF biases."""
    ks = jax.random.split(key, 10)
    std = 0.02
    w_in = std * jax.random.normal(ks[0], (D_IN, D_HID), jnp.float32)
    cls = std * jax.random.normal(ks[1], (1, D_HID), jnp.float32)
    emb = std * jax.random.normal(ks[2], (NUM_EMB, D_HID), jnp.float32)
    ln1_g = jnp.ones((1, D_HID), jnp.float32)
    ln1_b = jnp.zeros((1, D_HID), jnp.float32)
    wq = std * jax.random.normal(ks[3], (D_HID, D_HID), jnp.float32)
    wk = std * jax.random.normal(ks[4], (D_HID, D_HID), jnp.float32)
    wv = std * jax.random.normal(ks[5], (D_HID, D_HID), jnp.float32)
    wo = std * jax.random.normal(ks[6], (D_HID, D_HID), jnp.float32)
    ln2_g = jnp.ones((1, D_HID), jnp.float32)
    ln2_b = jnp.zeros((1, D_HID), jnp.float32)
    w1 = std * jax.random.normal(ks[7], (D_HID, D_FF), jnp.float32)
    w2 = std * jax.random.normal(ks[8], (D_FF, D_HID), jnp.float32)
    w_out = std * jax.random.normal(ks[9], (D_HID, D_OUT), jnp.float32)
    return (w_in, cls, emb, ln1_g, ln1_b, wq, wk, wv, wo,
            ln2_g, ln2_b, w1, w2, w_out)


if __name__ == "__main__":
    key = jax.random.PRNGKey(0)
    kx, kp = jax.random.split(key)
    x = jax.random.normal(kx, (B, S, D_IN), jnp.float32)
    params = init_params(kp)
    slab = jax.block_until_ready(pack_params(params))   # packed once, offline

    out = attenuator_forward(x, slab)
    out = jax.block_until_ready(out)
    assert out.shape == (B, D_OUT), out.shape
    assert jnp.all(jnp.isfinite(out))
    print("KERNEL_OK")
</pallas_src>

<mosaic_0001>
module attributes {stable_mosaic.version = 11 : i64} {
  func.func @attenuator_kernel(%arg0: memref<14x16xf32, #tpu.memory_space<vmem>>, %arg1: memref<160x128xf32, #tpu.memory_space<vmem>>, %arg2: memref<2x16xf32, #tpu.memory_space<vmem>>) attributes {dimension_semantics = [], scalar_prefetch = 0 : i64, scratch_operands = 0 : i64, tpu.core_type = #tpu.core_type<tc>} {
    %c0 = arith.constant 0 : index
    %c0_0 = arith.constant 0 : index
    %0 = vector.load %arg1[%c0, %c0_0] : memref<160x128xf32, #tpu.memory_space<vmem>>, vector<32x128xf32>
    %c32 = arith.constant 32 : index
    %c0_1 = arith.constant 0 : index
    %1 = vector.load %arg1[%c32, %c0_1] : memref<160x128xf32, #tpu.memory_space<vmem>>, vector<128x32xf32>
    %c32_2 = arith.constant 32 : index
    %c32_3 = arith.constant 32 : index
    %2 = vector.load %arg1[%c32_2, %c32_3] : memref<160x128xf32, #tpu.memory_space<vmem>>, vector<32x32xf32>
    %c32_4 = arith.constant 32 : index
    %c64 = arith.constant 64 : index
    %3 = vector.load %arg1[%c32_4, %c64] : memref<160x128xf32, #tpu.memory_space<vmem>>, vector<32x36xf32>
    %c32_5 = arith.constant 32 : index
    %c100 = arith.constant 100 : index
    %4 = vector.load %arg1[%c32_5, %c100] : memref<160x128xf32, #tpu.memory_space<vmem>>, vector<32x16xf32>
    %c64_6 = arith.constant 64 : index
    %c32_7 = arith.constant 32 : index
    %5 = vector.load %arg1[%c64_6, %c32_7] : memref<160x128xf32, #tpu.memory_space<vmem>>, vector<16x32xf32>
    %c80 = arith.constant 80 : index
    %c32_8 = arith.constant 32 : index
    %6 = vector.load %arg1[%c80, %c32_8] : memref<160x128xf32, #tpu.memory_space<vmem>>, vector<32x32xf32>
    %7 = vector.extract_strided_slice %6 {offsets = [0, 0], sizes = [4, 32], strides = [1, 1]} : vector<32x32xf32> to vector<4x32xf32>
    %8 = vector.extract_strided_slice %6 {offsets = [4, 0], sizes = [1, 32], strides = [1, 1]} : vector<32x32xf32> to vector<1x32xf32>
    %9 = vector.extract_strided_slice %6 {offsets = [5, 0], sizes = [1, 32], strides = [1, 1]} : vector<32x32xf32> to vector<1x32xf32>
    %10 = vector.extract_strided_slice %6 {offsets = [6, 0], sizes = [1, 32], strides = [1, 1]} : vector<32x32xf32> to vector<1x32xf32>
    %11 = vector.extract_strided_slice %6 {offsets = [7, 0], sizes = [1, 32], strides = [1, 1]} : vector<32x32xf32> to vector<1x32xf32>
    %12 = vector.extract_strided_slice %6 {offsets = [8, 0], sizes = [1, 32], strides = [1, 1]} : vector<32x32xf32> to vector<1x32xf32>
    %13 = vector.extract_strided_slice %6 {offsets = [9, 0], sizes = [1, 32], strides = [1, 1]} : vector<32x32xf32> to vector<1x32xf32>
    %14 = vector.extract_strided_slice %6 {offsets = [10, 0], sizes = [1, 32], strides = [1, 1]} : vector<32x32xf32> to vector<1x32xf32>
    %15 = vector.extract_strided_slice %6 {offsets = [11, 0], sizes = [1, 4], strides = [1, 1]} : vector<32x32xf32> to vector<1x4xf32>
    %16 = vector.extract_strided_slice %6 {offsets = [12, 0], sizes = [2, 14], strides = [1, 1]} : vector<32x32xf32> to vector<2x14xf32>
    %17 = vector.extract_strided_slice %6 {offsets = [14, 0], sizes = [14, 2], strides = [1, 1]} : vector<32x32xf32> to vector<14x2xf32>
    %c0_9 = arith.constant 0 : index
    %c0_10 = arith.constant 0 : index
    %18 = vector.load %arg0[%c0_9, %c0_10] : memref<14x16xf32, #tpu.memory_space<vmem>>, vector<14x16xf32>
    %cst = arith.constant dense<0.000000e+00> : vector<14x32xf32>
    %19 = tpu.matmul %18, %5, %cst {dimension_numbers = #tpu.dot_dimension_numbers<[1], [0], [0], [1], [0, 0, 1, 1], [], []>} : vector<14x16xf32>, vector<16x32xf32>, vector<14x32xf32> -> vector<14x32xf32>
    %20 = vector.broadcast %9 : vector<1x32xf32> to vector<14x32xf32>
    %21 = arith.addf %19, %20 : vector<14x32xf32>
    %cst_11 = arith.constant dense<0.000000e+00> : vector<14xf32>
    %22 = vector.multi_reduction <add>, %21, %cst_11 [1] : vector<14x32xf32> to vector<14xf32>
    %23 = vector.shape_cast %22 : vector<14xf32> to vector<14x1xf32>
    %cst_12 = arith.constant 3.200000e+01 : f32
    %24 = vector.broadcast %cst_12 : f32 to vector<14x1xf32>
    %25 = arith.divf %23, %24 : vector<14x1xf32>
    %26 = vector.broadcast %25 : vector<14x1xf32> to vector<14x32xf32>
    %27 = arith.subf %21, %26 : vector<14x32xf32>
    %28 = arith.mulf %27, %27 : vector<14x32xf32>
    %cst_13 = arith.constant dense<0.000000e+00> : vector<14xf32>
    %29 = vector.multi_reduction <add>, %28, %cst_13 [1] : vector<14x32xf32> to vector<14xf32>
    %30 = vector.shape_cast %29 : vector<14xf32> to vector<14x1xf32>
    %cst_14 = arith.constant 3.200000e+01 : f32
    %31 = vector.broadcast %cst_14 : f32 to vector<14x1xf32>
    %32 = arith.divf %30, %31 : vector<14x1xf32>
    %33 = vector.broadcast %25 : vector<14x1xf32> to vector<14x32xf32>
    %34 = arith.subf %21, %33 : vector<14x32xf32>
    %cst_15 = arith.constant 9.99999974E-6 : f32
    %35 = vector.broadcast %cst_15 : f32 to vector<14x1xf32>
    %36 = arith.addf %32, %35 : vector<14x1xf32>
    %37 = math.rsqrt %36 : vector<14x1xf32>
    %38 = vector.broadcast %37 : vector<14x1xf32> to vector<14x32xf32>
    %39 = arith.mulf %34, %38 : vector<14x32xf32>
    %40 = vector.broadcast %10 : vector<1x32xf32> to vector<14x32xf32>
    %41 = arith.mulf %39, %40 : vector<14x32xf32>
    %42 = vector.broadcast %11 : vector<1x32xf32> to vector<14x32xf32>
    %43 = arith.addf %41, %42 : vector<14x32xf32>
    %cst_16 = arith.constant dense<0.000000e+00> : vector<14x36xf32>
    %44 = tpu.matmul %43, %3, %cst_16 {dimension_numbers = #tpu.dot_dimension_numbers<[1], [0], [0], [1], [0, 0, 1, 1], [], []>} : vector<14x32xf32>, vector<32x36xf32>, vector<14x36xf32> -> vector<14x36xf32>
    %45 = vector.extract_strided_slice %44 {offsets = [0, 0], sizes = [14, 32], strides = [1, 1]} : vector<14x36xf32> to vector<14x32xf32>
    %46 = vector.extract_strided_slice %44 {offsets = [0, 32], sizes = [14, 4], strides = [1, 1]} : vector<14x36xf32> to vector<14x4xf32>
    %47 = vector.extract_strided_slice %46 {offsets = [0, 0], sizes = [7, 4], strides = [1, 1]} : vector<14x4xf32> to vector<7x4xf32>
    %cst_17 = arith.constant dense<0xFF800000> : vector<4xf32>
    %48 = vector.multi_reduction <maximumf>, %47, %cst_17 [0] : vector<7x4xf32> to vector<4xf32>
    %49 = vector.shape_cast %48 : vector<4xf32> to vector<1x4xf32>
    %50 = vector.extract_strided_slice %46 {offsets = [7, 0], sizes = [7, 4], strides = [1, 1]} : vector<14x4xf32> to vector<7x4xf32>
    %cst_18 = arith.constant dense<0xFF800000> : vector<4xf32>
    %51 = vector.multi_reduction <maximumf>, %50, %cst_18 [0] : vector<7x4xf32> to vector<4xf32>
    %52 = vector.shape_cast %51 : vector<4xf32> to vector<1x4xf32>
    %53 = tpu.concatenate %49, %52 in 0 : vector<1x4xf32>, vector<1x4xf32> -> vector<2x4xf32>
    %54 = vector.broadcast %15 : vector<1x4xf32> to vector<2x4xf32>
    %55 = arith.maximumf %53, %54 : vector<2x4xf32>
    %cst_19 = arith.constant dense<0.000000e+00> : vector<14x4xf32>
    %56 = tpu.matmul %17, %55, %cst_19 {dimension_numbers = #tpu.dot_dimension_numbers<[1], [0], [0], [1], [0, 0, 1, 1], [], []>} : vector<14x2xf32>, vector<2x4xf32>, vector<14x4xf32> -> vector<14x4xf32>
    %57 = arith.subf %46, %56 : vector<14x4xf32>
    %58 = math.exp %57 : vector<14x4xf32>
    %59 = vector.broadcast %15 : vector<1x4xf32> to vector<2x4xf32>
    %60 = arith.subf %59, %55 : vector<2x4xf32>
    %61 = math.exp %60 : vector<2x4xf32>
    %cst_20 = arith.constant dense<0.000000e+00> : vector<2x4xf32>
    %62 = tpu.matmul %16, %58, %cst_20 {dimension_numbers = #tpu.dot_dimension_numbers<[1], [0], [0], [1], [0, 0, 1, 1], [], []>} : vector<2x14xf32>, vector<14x4xf32>, vector<2x4xf32> -> vector<2x4xf32>
    %63 = arith.addf %62, %61 : vector<2x4xf32>
    %64 = tpu.reciprocal %63 {approx = true} : vector<2x4xf32> -> vector<2x4xf32>
    %cst_21 = arith.constant dense<0.000000e+00> : vector<14x32xf32>
    %65 = tpu.matmul %58, %7, %cst_21 {dimension_numbers = #tpu.dot_dimension_numbers<[1], [0], [0], [1], [0, 0, 1, 1], [], []>} : vector<14x4xf32>, vector<4x32xf32>, vector<14x32xf32> -> vector<14x32xf32>
    %66 = arith.mulf %65, %45 : vector<14x32xf32>
    %cst_22 = arith.constant dense<0.000000e+00> : vector<2x32xf32>
    %67 = tpu.matmul %16, %66, %cst_22 {dimension_numbers = #tpu.dot_dimension_numbers<[1], [0], [0], [1], [0, 0, 1, 1], [], []>} : vector<2x14xf32>, vector<14x32xf32>, vector<2x32xf32> -> vector<2x32xf32>
    %cst_23 = arith.constant dense<0.000000e+00> : vector<2x32xf32>
    %68 = tpu.matmul %61, %7, %cst_23 {dimension_numbers = #tpu.dot_dimension_numbers<[1], [0], [0], [1], [0, 0, 1, 1], [], []>} : vector<2x4xf32>, vector<4x32xf32>, vector<2x32xf32> -> vector<2x32xf32>
    %69 = vector.broadcast %14 : vector<1x32xf32> to vector<2x32xf32>
    %70 = arith.mulf %68, %69 : vector<2x32xf32>
    %71 = arith.addf %67, %70 : vector<2x32xf32>
    %cst_24 = arith.constant dense<0.000000e+00> : vector<2x32xf32>
    %72 = tpu.matmul %64, %7, %cst_24 {dimension_numbers = #tpu.dot_dimension_numbers<[1], [0], [0], [1], [0, 0, 1, 1], [], []>} : vector<2x4xf32>, vector<4x32xf32>, vector<2x32xf32> -> vector<2x32xf32>
    %73 = arith.mulf %71, %72 : vector<2x32xf32>
    %cst_25 = arith.constant dense<0.000000e+00> : vector<2x32xf32>
    %74 = tpu.matmul %73, %2, %cst_25 {dimension_numbers = #tpu.dot_dimension_numbers<[1], [0], [0], [1], [0, 0, 1, 1], [], []>} : vector<2x32xf32>, vector<32x32xf32>, vector<2x32xf32> -> vector<2x32xf32>
    %75 = vector.broadcast %8 : vector<1x32xf32> to vector<2x32xf32>
    %76 = arith.addf %75, %74 : vector<2x32xf32>
    %cst_26 = arith.constant dense<0.000000e+00> : vector<2xf32>
    %77 = vector.multi_reduction <add>, %76, %cst_26 [1] : vector<2x32xf32> to vector<2xf32>
    %78 = vector.shape_cast %77 : vector<2xf32> to vector<2x1xf32>
    %cst_27 = arith.constant 3.200000e+01 : f32
    %79 = vector.broadcast %cst_27 : f32 to vector<2x1xf32>
    %80 = arith.divf %78, %79 : vector<2x1xf32>
    %81 = vector.broadcast %80 : vector<2x1xf32> to vector<2x32xf32>
    %82 = arith.subf %76, %81 : vector<2x32xf32>
    %83 = arith.mulf %82, %82 : vector<2x32xf32>
    %cst_28 = arith.constant dense<0.000000e+00> : vector<2xf32>
    %84 = vector.multi_reduction <add>, %83, %cst_28 [1] : vector<2x32xf32> to vector<2xf32>
    %85 = vector.shape_cast %84 : vector<2xf32> to vector<2x1xf32>
    %cst_29 = arith.constant 3.200000e+01 : f32
    %86 = vector.broadcast %cst_29 : f32 to vector<2x1xf32>
    %87 = arith.divf %85, %86 : vector<2x1xf32>
    %88 = vector.broadcast %80 : vector<2x1xf32> to vector<2x32xf32>
    %89 = arith.subf %76, %88 : vector<2x32xf32>
    %cst_30 = arith.constant 9.99999974E-6 : f32
    %90 = vector.broadcast %cst_30 : f32 to vector<2x1xf32>
    %91 = arith.addf %87, %90 : vector<2x1xf32>
    %92 = math.rsqrt %91 : vector<2x1xf32>
    %93 = vector.broadcast %92 : vector<2x1xf32> to vector<2x32xf32>
    %94 = arith.mulf %89, %93 : vector<2x32xf32>
    %95 = vector.broadcast %12 : vector<1x32xf32> to vector<2x32xf32>
    %96 = arith.mulf %94, %95 : vector<2x32xf32>
    %97 = vector.broadcast %13 : vector<1x32xf32> to vector<2x32xf32>
    %98 = arith.addf %96, %97 : vector<2x32xf32>
    %cst_31 = arith.constant dense<0.000000e+00> : vector<2x128xf32>
    %99 = tpu.matmul %98, %0, %cst_31 {dimension_numbers = #tpu.dot_dimension_numbers<[1], [0], [0], [1], [0, 0, 1, 1], [], []>} : vector<2x32xf32>, vector<32x128xf32>, vector<2x128xf32> -> vector<2x128xf32>
    %cst_32 = arith.constant 5.000000e-01 : f32
    %100 = vector.broadcast %cst_32 : f32 to vector<2x128xf32>
    %101 = arith.mulf %100, %99 : vector<2x128xf32>
    %cst_33 = arith.constant 4.471500e-02 : f32
    %102 = vector.broadcast %cst_33 : f32 to vector<2x128xf32>
    %103 = arith.mulf %102, %99 : vector<2x128xf32>
    %104 = arith.mulf %103, %99 : vector<2x128xf32>
    %105 = arith.mulf %104, %99 : vector<2x128xf32>
    %106 = arith.addf %99, %105 : vector<2x128xf32>
    %cst_34 = arith.constant 0.797884583 : f32
    %107 = vector.broadcast %cst_34 : f32 to vector<2x128xf32>
    %108 = arith.mulf %107, %106 : vector<2x128xf32>
    %109 = math.tanh %108 : vector<2x128xf32>
    %cst_35 = arith.constant 1.000000e+00 : f32
    %110 = vector.broadcast %cst_35 : f32 to vector<2x128xf32>
    %111 = arith.addf %110, %109 : vector<2x128xf32>
    %112 = arith.mulf %101, %111 : vector<2x128xf32>
    %cst_36 = arith.constant dense<0.000000e+00> : vector<2x32xf32>
    %113 = tpu.matmul %112, %1, %cst_36 {dimension_numbers = #tpu.dot_dimension_numbers<[1], [0], [0], [1], [0, 0, 1, 1], [], []>} : vector<2x128xf32>, vector<128x32xf32>, vector<2x32xf32> -> vector<2x32xf32>
    %114 = arith.addf %76, %113 : vector<2x32xf32>
    %cst_37 = arith.constant dense<0.000000e+00> : vector<2x16xf32>
    %115 = tpu.matmul %114, %4, %cst_37 {dimension_numbers = #tpu.dot_dimension_numbers<[1], [0], [0], [1], [0, 0, 1, 1], [], []>} : vector<2x32xf32>, vector<32x16xf32>, vector<2x16xf32> -> vector<2x16xf32>
    %c0_38 = arith.constant 0 : index
    %c0_39 = arith.constant 0 : index
    %116 = vector.load %arg2[%c0_38, %c0_39] : memref<2x16xf32, #tpu.memory_space<vmem>>, vector<2x16xf32>
    tpu.vector_store %arg2[%c0_38, %c0_39], %115 {strides = array<i32>} : memref<2x16xf32, #tpu.memory_space<vmem>>, vector<2x16xf32>,
    return
  }
}

</mosaic_0001>

<llo_original>
// kernel: tpu_custom_call.1
$region0: #{tpu_custom_call.1}
  #allocation0 [shape = 'u32[]', space=smem, size = 0x4, offset = 0x4, fixed_abs, tag = 'smem constant byte address 0x4 - core index']
  #allocation1 [shape = 'u32[72,128]{1,0:T(1,128)}', space=vmem, size = 0x9000, scoped, tag = 'internal scratch']
  %s0 = inlined_call_operand.hbm [shape: f32[14,16], index: 0, kind: input, shape index: {}]
  %s1 = inlined_call_operand.hbm [shape: f32[160,128], index: 1, kind: input, shape index: {}]
  %s2 = inlined_call_operand.hbm [shape: f32[2,16], index: 2, kind: output, shape index: {}]
  %s3 = sld [smem:[#allocation0]]
  $region26: #{tpu_custom_call.1} parent=0
    _
  %s5 = ssub.s32 1, %s3
  %s6 = scalar_select 0, %s5, %s3
  $region1: #{tpu_custom_call.1} parent=0
    #allocation2 [shape = 'u8[8192]{0}', space=vmem, size = 0x2000, scoped, tag = 'input window, operand 0, single buffered']
    #allocation3 [shape = 's32[1]{0}', space=sflag, size = 0x4, scoped, tag = 'scoped memory for tpu_custom_call.1']
    #allocation4 [shape = 's32[1]{0}', space=sflag, size = 0x4, scoped, tag = 'scoped memory for tpu_custom_call.1']
    #allocation5 [shape = 'u8[81920]{0}', space=vmem, size = 0x14000, scoped, tag = 'input window, operand 1, single buffered']
    #allocation6 [shape = 's32[1]{0}', space=sflag, size = 0x4, scoped, tag = 'scoped memory for tpu_custom_call.1']
    #allocation7 [shape = 'u8[1024]{0}', space=vmem, size = 0x400, scoped, tag = 'output window, operand 0, single buffered']
    %7 = vsyncpa [#allocation3], 0
    %8 = vsyncpa [#allocation6], 0
    %9 = vsyncpa [#allocation4], 0
    // Predicated region
    $region2: #{tpu_custom_call.1} parent=1 // pred_check
      _
    $region3: #{tpu_custom_call.1} parent=1 // pred_check_branch
      %11 = sbr.rel (0) target = $region5
    $region4: #{tpu_custom_call.1} parent=1 // pred_region
      %13 = vsyncadd [#allocation3], 0
      %s14 = sshll.u32 %s0, 4
      %s15 = int_to_ptr.hbm [resolvable:$true] %s14
      %s16 = sshll.u32 [#allocation2], 4
      %s17 = int_to_ptr.vmem [resolvable:$true] %s16
      %22 = dma.hbm_to_vmem [thread:$0]  %s15, 256, %s17, [#allocation3], 128, 128, 8
    $region5: #{tpu_custom_call.1} parent=1 // pred_fallthru
      _
    // Predicated region
    $region6: #{tpu_custom_call.1} parent=1 // pred_check
      _
    $region7: #{tpu_custom_call.1} parent=1 // pred_check_branch
      %24 = sbr.rel (0) target = $region9
    $region8: #{tpu_custom_call.1} parent=1 // pred_region
      %26 = vsyncadd [#allocation6], 0
      %s27 = sshll.u32 %s1, 4
      %s28 = int_to_ptr.hbm [resolvable:$true] %s27
      %s29 = sshll.u32 [#allocation5], 4
      %s30 = int_to_ptr.vmem [resolvable:$true] %s29
      %35 = dma.hbm_to_vmem [thread:$0]  %s28, 2560, %s30, [#allocation6], 128, 128, 8
    $region9: #{tpu_custom_call.1} parent=1 // pred_fallthru
      _
    // Predicated region
    $region10: #{tpu_custom_call.1} parent=1 // pred_check
      _
    $region11: #{tpu_custom_call.1} parent=1 // pred_check_branch
      %37 = sbr.rel (0) target = $region13
    $region12: #{tpu_custom_call.1} parent=1 // pred_region
      %39 = dma.done [#allocation3], 256
    $region13: #{tpu_custom_call.1} parent=1 // pred_fallthru
      _
    // Predicated region
    $region14: #{tpu_custom_call.1} parent=1 // pred_check
      _
    $region15: #{tpu_custom_call.1} parent=1 // pred_check_branch
      %41 = sbr.rel (0) target = $region17
    $region16: #{tpu_custom_call.1} parent=1 // pred_region
      %43 = dma.done [#allocation6], 2560
    $region17: #{tpu_custom_call.1} parent=1 // pred_fallthru
      _
    %v44 = vld [vmem:[#allocation5] sm:$0xff]
    %v45 = vld [vmem:[#allocation5 + $0x8] sm:$0xff]
    %v46 = vld [vmem:[#allocation5 + $0x10] sm:$0xff]
    %v47 = vld [vmem:[#allocation5 + $0x18] sm:$0xff]
    %v48 = vld [vmem:[#allocation5 + $0x20] sm:$0xff]
    %v49 = vld [vmem:[#allocation5 + $0x28] sm:$0xff]
    %v50 = vld [vmem:[#allocation5 + $0x30] sm:$0xff]
    %v51 = vld [vmem:[#allocation5 + $0x38] sm:$0xff]
    %v52 = vld [vmem:[#allocation5 + $0x40] sm:$0xff]
    %v53 = vld [vmem:[#allocation5 + $0x48] sm:$0xff]
    %v54 = vld [vmem:[#allocation5 + $0x50] sm:$0xff]
    %v55 = vld [vmem:[#allocation5 + $0x58] sm:$0xff]
    %v56 = vld [vmem:[#allocation5 + $0x60] sm:$0xff]
    %v57 = vld [vmem:[#allocation5 + $0x68] sm:$0xff]
    %v58 = vld [vmem:[#allocation5 + $0x70] sm:$0xff]
    %v59 = vld [vmem:[#allocation5 + $0x78] sm:$0xff]
    %v60 = vld [vmem:[#allocation5 + $0x80] sm:$0xff]
    %v61 = vld [vmem:[#allocation5 + $0x88] sm:$0xff]
    %v62 = vld [vmem:[#allocation5 + $0x90] sm:$0xff]
    %v63 = vld [vmem:[#allocation5 + $0x98] sm:$0xff]
    %v64 = vld [vmem:[#allocation5 + $0x20] sm:$0xff]
    %v65 = vld [vmem:[#allocation5 + $0x28] sm:$0xff]
    %v66 = vld [vmem:[#allocation5 + $0x30] sm:$0xff]
    %v67 = vld [vmem:[#allocation5 + $0x38] sm:$0xff]
    %v68 = vld [vmem:[#allocation5 + $0x40] sm:$0xff]
    %v69 = vld [vmem:[#allocation5 + $0x48] sm:$0xff]
    %v70 = vld [vmem:[#allocation5 + $0x50] sm:$0xff]
    %v71 = vld [vmem:[#allocation5 + $0x58] sm:$0xff]
    %v72 = vld [vmem:[#allocation5 + $0x60] sm:$0xff]
    %v73 = vld [vmem:[#allocation5 + $0x68] sm:$0xff]
    %v74 = vld [vmem:[#allocation2] sm:$0xff]
    %v75 = vld [vmem:[#allocation2 + $0x8] sm:$0x3f]
    %v76 = vperm.slane %v70, 5
    %79 = vrot.lane.b32.xlu0 %v68, 96
    %v80 = vpop.permute.xlu0 %79
    %81 = vrot.lane.b32.xlu0 %v69, 96
    %v82 = vpop.permute.xlu0 %81
    %86 = vrot.lane.b32.xlu0 %v76, 96
    %v87 = vpop.permute.xlu0 %86
    %vm89 = vcmask 130048
    %v91 = vsel %vm89, %v74, 0
    %v94 = vsel %vm89, %v75, 0
    %96 = vmatpush.msra.mxu0 0.0
    %97 = vmatpush.msra.mxu0 0.0
    %98 = vmatpush.msra.mxu0 0.0
    %99 = vmatpush.msra.mxu0 0.0
    %100 = vmatpush.msra.mxu0 0.0
    %101 = vmatpush.msra.mxu0 0.0
    %102 = vmatpush.msra.mxu0 0.0
    %103 = vmatpush.msra.mxu0 0.0
    %104 = vmatpush.msra.mxu0 0.0
    %105 = vmatpush.msra.mxu0 0.0
    %106 = vmatpush.msra.mxu0 0.0
    %107 = vmatpush.msra.mxu0 0.0
    %108 = vmatpush.msra.mxu0 0.0
    %109 = vmatpush.msra.mxu0 0.0
    %110 = vmatpush.msra.mxu0 %v82
    %111 = vmatpush.msra.mxu0 %v80
    %112 = vmatmul.f32.gmra.mxu0 %v91
    %v113 = vpop.f32.mrf.mxu0
    %v114 = vadd.f32 %v87, %v113
    %115 = vmatmul.f32.gmra.mxu0 %v94
    %v116 = vpop.f32.mrf.mxu0
    %v117 = vadd.f32 %v87, %v116
    %118 = vdwg.mxu0
    %vm119 = vcmask 261120
    %v120 = vsel %vm119, %v114, 0.0
    %121 = vadd.xlane.f32.xlu0 %v120
    %v122 = vpop.xlane.xlu0 %121
    %vm123 = vcmask 259072
    %v124 = vsel %vm123, %v117, 0.0
    %125 = vadd.xlane.f32.xlu0 %v124
    %v126 = vpop.xlane.xlu0 %125
    %v127 = vrcp.pop 32.0
    %v128 = vmul.f32 32.0, %v127
    %v129 = vsub.f32 1.0, %v128
    %v130 = vmul.f32 %v127, %v129
    %v131 = vadd.f32 %v127, %v130
    %vm132 = vweird.f32 %v127
    %v133 = vsel %vm132, %v127, %v131
    %v134 = vmul.f32 %v122, %v133
    %v135 = vmul.f32 %v126, %v133
    %v136 = vsub.f32 %v114, %v134
    %v137 = vsub.f32 %v117, %v135
    %v138 = vmul.f32 %v136, %v136
    %v139 = vmul.f32 %v137, %v137
    %v140 = vsel %vm119, %v138, 0.0
    %141 = vadd.xlane.f32.xlu0 %v140
    %v142 = vpop.xlane.xlu0 %141
    %v143 = vsel %vm123, %v139, 0.0
    %144 = vadd.xlane.f32.xlu0 %v143
    %v145 = vpop.xlane.xlu0 %144
    %v146 = vmul.f32 %v142, %v133
    %v147 = vmul.f32 %v145, %v133
    %v148 = vadd.f32 %v146, 1e-05
    %v149 = vadd.f32 %v147, 1e-05
    %v150 = vrsqrt.pop %v148
    %v151 = vmul.f32 %v150, %v148
    %v152 = vmul.f32 %v151, %v150
    %v153 = vmul.f32 0.5, %v152
    %v154 = vsub.f32 1.5, %v153
    %v155 = vmul.f32 %v150, %v154
    %vm156 = vweird.f32 %v148
    %vm157 = vweird.f32 %v150
    %vm158 = vmor %vm156, %vm157
    %v159 = vsel %vm158, %v150, %v155
    %v160 = vrsqrt.pop %v149
    %v161 = vmul.f32 %v160, %v149
    %v162 = vmul.f32 %v161, %v160
    %v163 = vmul.f32 0.5, %v162
    %v164 = vsub.f32 1.5, %v163
    %v165 = vmul.f32 %v160, %v164
    %vm166 = vweird.f32 %v149
    %vm167 = vweird.f32 %v160
    %vm168 = vmor %vm166, %vm167
    %v169 = vsel %vm168, %v160, %v165
    %v170 = vmul.f32 %v136, %v159
    %v171 = vmul.f32 %v137, %v169
    %v172 = vperm.slane %v70, 6
    %174 = vrot.lane.b32.xlu0 %v172, 96
    %v175 = vpop.permute.xlu0 %174
    %v177 = vmul.f32 %v170, %v175
    %v178 = vmul.f32 %v171, %v175
    %v179 = vperm.slane %v70, 7
    %181 = vrot.lane.b32.xlu0 %v179, 96
    %v182 = vpop.permute.xlu0 %181
    %v184 = vadd.f32 %v177, %v182
    %v185 = vadd.f32 %v178, %v182
    %190 = vrot.lane.b32.xlu0 %v64, 64
    %v191 = vpop.permute.xlu0 %190
    %192 = vrot.lane.b32.xlu0 %v65, 64
    %v193 = vpop.permute.xlu0 %192
    %194 = vrot.lane.b32.xlu0 %v66, 64
    %v195 = vpop.permute.xlu0 %194
    %196 = vrot.lane.b32.xlu0 %v67, 64
    %v197 = vpop.permute.xlu0 %196
    %v203 = vsel %vm119, %v184, 0
    %v206 = vsel %vm119, %v185, 0
    %208 = vmatpush.msra.mxu0 0.0
    %209 = vmatpush.msra.mxu0 0.0
    %210 = vmatpush.msra.mxu0 0.0
    %211 = vmatpush.msra.mxu0 0.0
    %212 = vmatpush.msra.mxu0 0.0
    %213 = vmatpush.msra.mxu0 0.0
    %214 = vmatpush.msra.mxu0 0.0
    %215 = vmatpush.msra.mxu0 0.0
    %216 = vmatpush.msra.mxu0 0.0
    %217 = vmatpush.msra.mxu0 0.0
    %218 = vmatpush.msra.mxu0 0.0
    %219 = vmatpush.msra.mxu0 0.0
    %220 = vmatpush.msra.mxu0 %v197
    %221 = vmatpush.msra.mxu0 %v195
    %222 = vmatpush.msra.mxu0 %v193
    %223 = vmatpush.msra.mxu0 %v191
    %224 = vmatmul.f32.gmra.mxu0 %v203
    %v225 = vpop.f32.mrf.mxu0
    %v226 = vadd.f32 0.0, %v225
    %227 = vmatmul.f32.gmra.mxu0 %v206
    %v228 = vpop.f32.mrf.mxu0
    %v229 = vadd.f32 0.0, %v228
    %230 = vdwg.mxu0
    %vm231 = vcmask 293120
    %v232 = vsel %vm231, %v226, -inf
    %v233 = vrot.slane %v232, 4
    %v234 = vmax.f32 %v232, %v233
    %v235 = vrot.slane %v234, 2
    %v236 = vmax.f32 %v234, %v235
    %v237 = vrot.slane %v236, 1
    %v238 = vmax.f32 %v236, %v237
    %vm239 = vcmask 294151
    %v240 = vsel %vm239, %v226, -inf
    %vm241 = vcmask 292096
    %v242 = vsel %vm241, %v229, -inf
    %v243 = vmax.f32 %v240, %v242
    %v244 = vrot.slane %v243, 4
    %v245 = vmax.f32 %v243, %v244
    %v246 = vrot.slane %v245, 2
    %v247 = vmax.f32 %v245, %v246
    %v248 = vrot.slane %v247, 1
    %v249 = vmax.f32 %v247, %v248
    %vm250 = vcmask 1040384
    %v251 = vsel %vm250, %v238, %v249
    %v252 = vperm.slane %v71, 3
    %v253 = vmax.f32 %v251, %v252
    %vm257 = vcmask 1041408
    %v258 = vrot.slane %v71, 6
    %v259 = vrot.slane %v72, 6
    %v260 = vsel %vm257, %v258, %v259
    %v261 = vrot.slane %v73, 6
    %v262 = vsel %vm257, %v259, %v261
    %263 = vrot.lane.b32.xlu0 %v260, 96
    %v264 = vpop.permute.xlu0 %263
    %265 = vrot.lane.b32.xlu0 %v262, 96
    %v266 = vpop.permute.xlu0 %265
    %268 = vrot.lane.b32.xlu0 %v253, 96
    %v269 = vpop.permute.xlu0 %268
    %vm270 = vcmask 15360
    %v271 = vsel %vm270, %v264, 0
    %v273 = vsel %vm270, %v266, 0
    %v275 = vsel %vm257, %v269, 0
    %277 = vmatpush.msra.mxu0 0.0
    %278 = vmatpush.msra.mxu0 0.0
    %279 = vmatpush.msra.mxu0 0.0
    %280 = vmatpush.msra.mxu0 0.0
    %281 = vmatpush.msra.mxu0 0.0
    %282 = vmatpush.msra.mxu0 0.0
    %283 = vmatpush.msra.mxu0 0.0
    %284 = vmatpush.msra.mxu0 0.0
    %285 = vmatpush.msra.mxu0 0.0
    %286 = vmatpush.msra.mxu0 0.0
    %287 = vmatpush.msra.mxu0 0.0
    %288 = vmatpush.msra.mxu0 0.0
    %289 = vmatpush.msra.mxu0 0.0
    %290 = vmatpush.msra.mxu0 0.0
    %291 = vmatpush.msra.mxu0 0.0
    %292 = vmatpush.msra.mxu0 %v275
    %293 = vmatmul.f32.gmra.mxu0 %v271
    %v294 = vpop.f32.mrf.mxu0
    %v295 = vadd.f32 0.0, %v294
    %296 = vmatmul.f32.gmra.mxu0 %v273
    %v297 = vpop.f32.mrf.mxu0
    %v298 = vadd.f32 0.0, %v297
    %299 = vdwg.mxu0
    %302 = vrot.lane.b32.xlu0 %v295, 32
    %v303 = vpop.permute.xlu0 %302
    %304 = vrot.lane.b32.xlu0 %v298, 32
    %v305 = vpop.permute.xlu0 %304
    %v308 = vsub.f32 %v226, %v303
    %v309 = vsub.f32 %v229, %v305
    %v310 = vmul.f32 %v308, 1.442695
    %v311 = vpow.pop %v310
    %v312 = vmul.f32 %v309, 1.442695
    %v313 = vpow.pop %v312
    %v314 = vsub.f32 %v252, %v253
    %v315 = vmul.f32 %v314, 1.442695
    %v316 = vpow.pop %v315
    %v317 = vrot.slane %v71, 4
    %318 = vrot.lane.b32.xlu0 %v317, 96
    %v319 = vpop.permute.xlu0 %318
    %322 = vrot.lane.b32.xlu0 %v311, 96
    %v323 = vpop.permute.xlu0 %322
    %324 = vrot.lane.b32.xlu0 %v313, 96
    %v325 = vpop.permute.xlu0 %324
    %328 = vrot.lane.b32.xlu0 %v316, 96
    %v329 = vpop.permute.xlu0 %328
    %vm331 = vcmask 113664
    %v332 = vsel %vm331, %v319, 0
    %vm334 = vcmask 1045504
    %v335 = vsel %vm334, %v325, 0
    %337 = vmatpush.msra.mxu0 0.0
    %338 = vmatpush.msra.mxu0 0.0
    %339 = vmatpush.msra.mxu0 0.0
    %340 = vmatpush.msra.mxu0 0.0
    %341 = vmatpush.msra.mxu0 0.0
    %342 = vmatpush.msra.mxu0 0.0
    %343 = vmatpush.msra.mxu0 0.0
    %344 = vmatpush.msra.mxu0 0.0
    %345 = vmatpush.msra.mxu0 0.0
    %346 = vmatpush.msra.mxu0 0.0
    %347 = vmatpush.msra.mxu0 0.0
    %348 = vmatpush.msra.mxu0 0.0
    %349 = vmatpush.msra.mxu0 0.0
    %350 = vmatpush.msra.mxu0 0.0
    %351 = vmatpush.msra.mxu0 %v335
    %352 = vmatpush.msra.mxu0 %v323
    %353 = vmatmul.f32.gmra.mxu0 %v332
    %v354 = vpop.f32.mrf.mxu0
    %v355 = vadd.f32 %v329, %v354
    %356 = vdwg.mxu0
    %v357 = vrcp.pop %v355
    %359 = vrot.lane.b32.xlu0 %v70, 96
    %v360 = vpop.permute.xlu0 %359
    %vm361 = vcmask 31744
    %v362 = vsel %vm361, %v323, 0
    %v364 = vsel %vm361, %v325, 0
    %vm366 = vcmask 1043456
    %v367 = vsel %vm366, %v360, 0
    %369 = vmatpush.msra.mxu0 0.0
    %370 = vmatpush.msra.mxu0 0.0
    %371 = vmatpush.msra.mxu0 0.0
    %372 = vmatpush.msra.mxu0 0.0
    %373 = vmatpush.msra.mxu0 0.0
    %374 = vmatpush.msra.mxu0 0.0
    %375 = vmatpush.msra.mxu0 0.0
    %376 = vmatpush.msra.mxu0 0.0
    %377 = vmatpush.msra.mxu0 0.0
    %378 = vmatpush.msra.mxu0 0.0
    %379 = vmatpush.msra.mxu0 0.0
    %380 = vmatpush.msra.mxu0 0.0
    %381 = vmatpush.msra.mxu0 0.0
    %382 = vmatpush.msra.mxu0 0.0
    %383 = vmatpush.msra.mxu0 0.0
    %384 = vmatpush.msra.mxu0 %v367
    %385 = vmatmul.f32.gmra.mxu0 %v362
    %v386 = vpop.f32.mrf.mxu0
    %v387 = vadd.f32 0.0, %v386
    %388 = vmatmul.f32.gmra.mxu0 %v364
    %v389 = vpop.f32.mrf.mxu0
    %v390 = vadd.f32 0.0, %v389
    %391 = vdwg.mxu0
    %v392 = vmul.f32 %v387, %v226
    %v393 = vmul.f32 %v390, %v229
    %v394 = vsel %vm361, %v329, 0
    %396 = vmatpush.msra.mxu0 0.0
    %397 = vmatpush.msra.mxu0 0.0
    %398 = vmatpush.msra.mxu0 0.0
    %399 = vmatpush.msra.mxu0 0.0
    %400 = vmatpush.msra.mxu0 0.0
    %401 = vmatpush.msra.mxu0 0.0
    %402 = vmatpush.msra.mxu0 0.0
    %403 = vmatpush.msra.mxu0 0.0
    %404 = vmatpush.msra.mxu0 0.0
    %405 = vmatpush.msra.mxu0 0.0
    %406 = vmatpush.msra.mxu0 0.0
    %407 = vmatpush.msra.mxu0 0.0
    %408 = vmatpush.msra.mxu0 0.0
    %409 = vmatpush.msra.mxu0 0.0
    %410 = vmatpush.msra.mxu0 0.0
    %411 = vmatpush.msra.mxu0 %v367
    %412 = vmatmul.f32.gmra.mxu0 %v394
    %v413 = vpop.f32.mrf.mxu0
    %v414 = vadd.f32 0.0, %v413
    %415 = vdwg.mxu0
    %v416 = vperm.slane %v71, 2
    %418 = vrot.lane.b32.xlu0 %v416, 96
    %v419 = vpop.permute.xlu0 %418
    %v421 = vmul.f32 %v414, %v419
    %v423 = vsel %vm334, %v393, 0
    %425 = vmatpush.msra.mxu0 0.0
    %426 = vmatpush.msra.mxu0 0.0
    %427 = vmatpush.msra.mxu0 0.0
    %428 = vmatpush.msra.mxu0 0.0
    %429 = vmatpush.msra.mxu0 0.0
    %430 = vmatpush.msra.mxu0 0.0
    %431 = vmatpush.msra.mxu0 0.0
    %432 = vmatpush.msra.mxu0 0.0
    %433 = vmatpush.msra.mxu0 0.0
    %434 = vmatpush.msra.mxu0 0.0
    %435 = vmatpush.msra.mxu0 0.0
    %436 = vmatpush.msra.mxu0 0.0
    %437 = vmatpush.msra.mxu0 0.0
    %438 = vmatpush.msra.mxu0 0.0
    %439 = vmatpush.msra.mxu0 %v423
    %440 = vmatpush.msra.mxu0 %v392
    %441 = vmatmul.f32.gmra.mxu0 %v332
    %v442 = vpop.f32.mrf.mxu0
    %v443 = vadd.f32 %v421, %v442
    %444 = vdwg.mxu0
    %v446 = vsel %vm361, %v357, 0
    %448 = vmatpush.msra.mxu0 0.0
    %449 = vmatpush.msra.mxu0 0.0
    %450 = vmatpush.msra.mxu0 0.0
    %451 = vmatpush.msra.mxu0 0.0
    %452 = vmatpush.msra.mxu0 0.0
    %453 = vmatpush.msra.mxu0 0.0
    %454 = vmatpush.msra.mxu0 0.0
    %455 = vmatpush.msra.mxu0 0.0
    %456 = vmatpush.msra.mxu0 0.0
    %457 = vmatpush.msra.mxu0 0.0
    %458 = vmatpush.msra.mxu0 0.0
    %459 = vmatpush.msra.mxu0 0.0
    %460 = vmatpush.msra.mxu0 0.0
    %461 = vmatpush.msra.mxu0 0.0
    %462 = vmatpush.msra.mxu0 0.0
    %463 = vmatpush.msra.mxu0 %v367
    %464 = vmatmul.f32.gmra.mxu0 %v446
    %v465 = vpop.f32.mrf.mxu0
    %v466 = vadd.f32 0.0, %v465
    %467 = vdwg.mxu0
    %v468 = vmul.f32 %v443, %v466
    %469 = vrot.lane.b32.xlu0 %v64, 96
    %v470 = vpop.permute.xlu0 %469
    %471 = vrot.lane.b32.xlu0 %v65, 96
    %v472 = vpop.permute.xlu0 %471
    %473 = vrot.lane.b32.xlu0 %v66, 96
    %v474 = vpop.permute.xlu0 %473
    %475 = vrot.lane.b32.xlu0 %v67, 96
    %v476 = vpop.permute.xlu0 %475
    %v482 = vsel %vm119, %v468, 0
    %484 = vmatpush.msra.mxu0 0.0
    %485 = vmatpush.msra.mxu0 0.0
    %486 = vmatpush.msra.mxu0 0.0
    %487 = vmatpush.msra.mxu0 0.0
    %488 = vmatpush.msra.mxu0 0.0
    %489 = vmatpush.msra.mxu0 0.0
    %490 = vmatpush.msra.mxu0 0.0
    %491 = vmatpush.msra.mxu0 0.0
    %492 = vmatpush.msra.mxu0 0.0
    %493 = vmatpush.msra.mxu0 0.0
    %494 = vmatpush.msra.mxu0 0.0
    %495 = vmatpush.msra.mxu0 0.0
    %496 = vmatpush.msra.mxu0 %v476
    %497 = vmatpush.msra.mxu0 %v474
    %498 = vmatpush.msra.mxu0 %v472
    %499 = vmatpush.msra.mxu0 %v470
    %500 = vmatmul.f32.gmra.mxu0 %v482
    %v501 = vpop.f32.mrf.mxu0
    %v502 = vadd.f32 0.0, %v501
    %503 = vdwg.mxu0
    %v504 = vperm.slane %v70, 4
    %506 = vrot.lane.b32.xlu0 %v502, 32
    %v507 = vpop.permute.xlu0 %506
    %v509 = vadd.f32 %v504, %v507
    %511 = vrot.lane.b32.xlu0 %v509, 96
    %v512 = vpop.permute.xlu0 %511
    %vm514 = vcmask 254976
    %v515 = vsel %vm514, %v512, 0.0
    %516 = vadd.xlane.f32.xlu0 %v515
    %v517 = vpop.xlane.xlu0 %516
    %v518 = vmul.f32 %v517, %v133
    %v519 = vsub.f32 %v509, %v518
    %v520 = vmul.f32 %v519, %v519
    %522 = vrot.lane.b32.xlu0 %v520, 96
    %v523 = vpop.permute.xlu0 %522
    %v525 = vsel %vm514, %v523, 0.0
    %526 = vadd.xlane.f32.xlu0 %v525
    %v527 = vpop.xlane.xlu0 %526
    %v528 = vmul.f32 %v527, %v133
    %v529 = vadd.f32 %v528, 1e-05
    %v530 = vrsqrt.pop %v529
    %v531 = vmul.f32 %v530, %v529
    %v532 = vmul.f32 %v531, %v530
    %v533 = vmul.f32 0.5, %v532
    %v534 = vsub.f32 1.5, %v533
    %v535 = vmul.f32 %v530, %v534
    %vm536 = vweird.f32 %v529
    %vm537 = vweird.f32 %v530
    %vm538 = vmor %vm536, %vm537
    %v539 = vsel %vm538, %v530, %v535
    %v540 = vmul.f32 %v519, %v539
    %v541 = vperm.slane %v71, 0
    %v542 = vmul.f32 %v540, %v541
    %v543 = vperm.slane %v71, 1
    %v544 = vadd.f32 %v542, %v543
    %546 = vrot.lane.b32.xlu0 %v544, 96
    %v547 = vpop.permute.xlu0 %546
    %v548 = vsel %vm119, %v547, 0
    %550 = vmatpush.msra.mxu0 0.0
    %551 = vmatpush.msra.mxu0 0.0
    %552 = vmatpush.msra.mxu0 0.0
    %553 = vmatpush.msra.mxu0 0.0
    %554 = vmatpush.msra.mxu0 0.0
    %555 = vmatpush.msra.mxu0 0.0
    %556 = vmatpush.msra.mxu0 0.0
    %557 = vmatpush.msra.mxu0 0.0
    %558 = vmatpush.msra.mxu0 0.0
    %559 = vmatpush.msra.mxu0 0.0
    %560 = vmatpush.msra.mxu0 0.0
    %561 = vmatpush.msra.mxu0 0.0
    %562 = vmatpush.msra.mxu0 %v47
    %563 = vmatpush.msra.mxu0 %v46
    %564 = vmatpush.msra.mxu0 %v45
    %565 = vmatpush.msra.mxu0 %v44
    %566 = vmatmul.f32.gmra.mxu0 %v548
    %v567 = vpop.f32.mrf.mxu0
    %v568 = vadd.f32 0.0, %v567
    %569 = vdwg.mxu0
    %v570 = vmul.f32 %v568, 0.5
    %v571 = vmul.f32 %v568, 0.044715
    %v572 = vmul.f32 %v571, %v568
    %v573 = vmul.f32 %v572, %v568
    %v574 = vadd.f32 %v568, %v573
    %v575 = vmul.f32 %v574, 0.7978846
    %v576 = vtanh.pop %v575
    %v577 = vadd.f32 %v576, 1.0
    %v578 = vmul.f32 %v570, %v577
    %579 = vmatpush.msra.mxu0 %v63
    %580 = vmatpush.msra.mxu0 %v62
    %581 = vmatpush.msra.mxu0 %v61
    %582 = vmatpush.msra.mxu0 %v60
    %583 = vmatpush.msra.mxu0 %v59
    %584 = vmatpush.msra.mxu0 %v58
    %585 = vmatpush.msra.mxu0 %v57
    %586 = vmatpush.msra.mxu0 %v56
    %587 = vmatpush.msra.mxu0 %v55
    %588 = vmatpush.msra.mxu0 %v54
    %589 = vmatpush.msra.mxu0 %v53
    %590 = vmatpush.msra.mxu0 %v52
    %591 = vmatpush.msra.mxu0 %v51
    %592 = vmatpush.msra.mxu0 %v50
    %593 = vmatpush.msra.mxu0 %v49
    %594 = vmatpush.msra.mxu0 %v48
    %595 = vmatmul.f32.gmra.mxu0 %v578
    %v596 = vpop.f32.mrf.mxu0
    %v597 = vadd.f32 0.0, %v596
    %598 = vdwg.mxu0
    %600 = vrot.lane.b32.xlu0 %v597, 32
    %v601 = vpop.permute.xlu0 %600
    %v603 = vadd.f32 %v509, %v601
    %605 = vrot.lane.b32.xlu0 %v603, 96
    %v606 = vpop.permute.xlu0 %605
    %607 = vrot.lane.b32.xlu0 %v64, 28
    %v608 = vpop.permute.xlu0 %607
    %609 = vrot.lane.b32.xlu0 %v65, 28
    %v610 = vpop.permute.xlu0 %609
    %611 = vrot.lane.b32.xlu0 %v66, 28
    %v612 = vpop.permute.xlu0 %611
    %613 = vrot.lane.b32.xlu0 %v67, 28
    %v614 = vpop.permute.xlu0 %613
    %v619 = vsel %vm119, %v606, 0
    %621 = vmatpush.msra.mxu0 0.0
    %622 = vmatpush.msra.mxu0 0.0
    %623 = vmatpush.msra.mxu0 0.0
    %624 = vmatpush.msra.mxu0 0.0
    %625 = vmatpush.msra.mxu0 0.0
    %626 = vmatpush.msra.mxu0 0.0
    %627 = vmatpush.msra.mxu0 0.0
    %628 = vmatpush.msra.mxu0 0.0
    %629 = vmatpush.msra.mxu0 0.0
    %630 = vmatpush.msra.mxu0 0.0
    %631 = vmatpush.msra.mxu0 0.0
    %632 = vmatpush.msra.mxu0 0.0
    %633 = vmatpush.msra.mxu0 %v614
    %634 = vmatpush.msra.mxu0 %v612
    %635 = vmatpush.msra.mxu0 %v610
    %636 = vmatpush.msra.mxu0 %v608
    %637 = vmatmul.f32.gmra.mxu0 %v619
    %v638 = vpop.f32.mrf.mxu0
    %v639 = vadd.f32 0.0, %v638
    %640 = vdwg.mxu0
    %vm641 = vcmask 123904
    %642 = vst.msk [vmem:[#allocation7] sm:$0x3] %vm641, %v639
    // Predicated region
    $region18: #{tpu_custom_call.1} parent=1 // pred_check
      _
    $region19: #{tpu_custom_call.1} parent=1 // pred_check_branch
      %644 = sbr.rel (0) target = $region21
    $region20: #{tpu_custom_call.1} parent=1 // pred_region
      %646 = vsyncadd [#allocation4], 0
      %s648 = sshll.u32 [#allocation7], 4
      %s649 = int_to_ptr.vmem [resolvable:$true] %s648
      %s650 = sshll.u32 %s2, 4
      %s651 = int_to_ptr.hbm [resolvable:$true] %s650
      %653 = dma.vmem_to_hbm [thread:$0]  %s649, 32, %s651, [#allocation4]
    $region21: #{tpu_custom_call.1} parent=1 // pred_fallthru
      _
    // Predicated region
    $region22: #{tpu_custom_call.1} parent=1 // pred_check
      _
    $region23: #{tpu_custom_call.1} parent=1 // pred_check_branch
      %655 = sbr.rel (0) target = $region25
    $region24: #{tpu_custom_call.1} parent=1 // pred_region
      %657 = dma.done [#allocation4], 32
    $region25: #{tpu_custom_call.1} parent=1 // pred_fallthru
      _
    %658 = vsyncpa [#allocation3], 1
    %659 = vsyncpa [#allocation6], 1
    %660 = vsyncpa [#allocation4], 1

</llo_original>
